<compile_context>
chip_gen: v7x
topology: tpu7x:2x2x1
jax: 0.10.0
libtpu: 0.0.40
codegen_flags: <defaults>
</compile_context>

<pallas_src>
import math

import jax
import jax.numpy as jnp
from jax.experimental import pallas as pl
from jax.experimental.pallas import tpu as pltpu

_EPS = 1e-12  # same eps as torch.nn.functional.normalize default


def _round_up(x, m):
    return ((x + m - 1) // m) * m


def arc_margin_kernel(x_ref, w_ref, o_ref):
    """x_ref: (B, D), w_ref: (k, D, TN), o_ref: (B, TN)."""
    x = x_ref[...]                                            # (B, D)

    # rsqrt(max(||x||^2, eps^2)) == 1 / max(||x||, eps)  (exact EUP rsqrt).
    xf = x.astype(jnp.float32)
    inv_x = jax.lax.rsqrt(
        jnp.maximum(jnp.sum(xf * xf, axis=-1, keepdims=True), _EPS * _EPS))

    k = w_ref.shape[0]  # small static constant (e.g. 3) -> unrolled loop
    cos_max = None
    for j in range(k):
        w_j = w_ref[j]                                        # (D, TN)
        wf = w_j.astype(jnp.float32)
        inv_w = jax.lax.rsqrt(
            jnp.maximum(jnp.sum(wf * wf, axis=0, keepdims=True),
                        _EPS * _EPS))                         # (1, TN)
        # Un-normalized matmul on the MXU, normalization folded in afterwards.
        c = jnp.dot(x, w_j, preferred_element_type=jnp.float32) * inv_w
        cos_max = c if cos_max is None else jnp.maximum(cos_max, c)

    o_ref[...] = (cos_max * inv_x).astype(o_ref.dtype)


def arc_margin_head(features, weight, out_features, k, *, tile_n=None,
                    vmem_budget_bytes=8 * 1024 * 1024):
    """features: (B, in_features); weight: (out_features*k, in_features)."""
    B, D = features.shape
    assert weight.shape == (out_features * k, D)
    itemsize = jnp.dtype(features.dtype).itemsize

    # ---- host-side glue (pure layout, no math) --------------------------
    # (out*k, D) -> (out, k, D) -> (k, D, out): row o*k+j becomes w_t[j, :, o],
    # matching torch's view(-1, out_features, k) followed by max(dim=2).
    w_t = jnp.transpose(weight.reshape(out_features, k, D), (1, 2, 0))

    # Pad batch to a sublane multiple, out_features to a lane-aligned tile.
    B_pad = _round_up(B, 8)
    out_128 = _round_up(out_features, 128)

    if tile_n is None:
        # Largest 128-multiple tile whose weight slab fits the VMEM budget
        # (double-buffered by the pipeline).  Per-generation tuning: pass a
        # smaller tile_n (or bf16 inputs) on v7x if D is large.
        per_col = k * D * itemsize
        tile_n = max(128, (vmem_budget_bytes // (per_col * 128)) * 128)
    tile_n = min(_round_up(tile_n, 128), out_128)
    out_pad = _round_up(out_features, tile_n)

    x_pad = jnp.pad(features, ((0, B_pad - B), (0, 0)))
    w_pad = jnp.pad(w_t, ((0, 0), (0, 0), (0, out_pad - out_features)))

    # VMEM bookkeeping: double-buffered weight tile dominates.
    w_tile_bytes = k * D * tile_n * itemsize
    est = 2 * w_tile_bytes + 2 * B_pad * D * itemsize + 2 * B_pad * tile_n * 4
    vmem_limit = int(min(max(est + (4 << 20), 32 << 20), 64 << 20))

    out = pl.pallas_call(
        arc_margin_kernel,
        out_shape=jax.ShapeDtypeStruct((B_pad, out_pad), jnp.float32),
        grid=(out_pad // tile_n,),
        in_specs=[
            pl.BlockSpec((B_pad, D), lambda n: (0, 0)),        # batch resident
            pl.BlockSpec((k, D, tile_n), lambda n: (0, 0, n)),  # streamed
        ],
        out_specs=pl.BlockSpec((B_pad, tile_n), lambda n: (0, n)),
        compiler_params=pltpu.CompilerParams(
            dimension_semantics=("parallel",),
            vmem_limit_bytes=vmem_limit,
        ),
    )(x_pad, w_pad)

    return out[:B, :out_features]


def _reference(features, weight, out_features, k):
    """Pure-JAX reference mirroring the PyTorch forward."""
    xn = features / jnp.maximum(
        jnp.linalg.norm(features, axis=1, keepdims=True), _EPS)
    wn = weight / jnp.maximum(
        jnp.linalg.norm(weight, axis=1, keepdims=True), _EPS)
    cos_all = (xn @ wn.T).reshape(-1, out_features, k)
    return jnp.max(cos_all, axis=2)


def _run_case(batch, in_features, out_features, k, seed, tile_n=None):
    key = jax.random.PRNGKey(seed)
    kx, kw = jax.random.split(key)
    features = jax.random.normal(kx, (batch, in_features), dtype=jnp.float32)
    stdv = 1.0 / math.sqrt(in_features)  # matches reset_parameters()
    weight = jax.random.uniform(
        kw, (out_features * k, in_features),
        minval=-stdv, maxval=stdv, dtype=jnp.float32)

    out = arc_margin_head(features, weight, out_features, k, tile_n=tile_n)
    out = jax.block_until_ready(out)

    ref = _reference(features, weight, out_features, k)
    assert out.shape == (batch, out_features)
    assert jnp.allclose(out, ref, atol=1e-5, rtol=1e-5), (out, ref)


if __name__ == "__main__":
    # Small shapes consistent with the module (single-tile path, padded).
    _run_case(batch=2, in_features=32, out_features=8, k=3, seed=0)
    # Slightly larger case exercising the multi-tile grid + batch padding.
    _run_case(batch=5, in_features=128, out_features=384, k=3, seed=0,
              tile_n=128)
    print("KERNEL_OK")
</pallas_src>

<mosaic_0001>
module attributes {stable_mosaic.version = 11 : i64} {
  func.func @arc_margin_kernel(%arg0: i32, %arg1: memref<8x32xf32, #tpu.memory_space<vmem>>, %arg2: memref<3x32x128xf32, #tpu.memory_space<vmem>>, %arg3: memref<8x128xf32, #tpu.memory_space<vmem>>) attributes {dimension_semantics = [#tpu.dimension_semantics<parallel>], iteration_bounds = array<i64: 1>, scalar_prefetch = 0 : i64, scratch_operands = 0 : i64, tpu.core_type = #tpu.core_type<tc>, window_params = [{pipeline_mode = #tpu.pipeline_mode<synchronous>, transform_indices = @transform_0, window_bounds = array<i64: 8, 32>}, {transform_indices = @transform_1, window_bounds = array<i64: 3, 32, 128>}, {transform_indices = @transform_2, window_bounds = array<i64: 8, 128>}]} {
    %c0 = arith.constant 0 : index
    %c0_0 = arith.constant 0 : index
    %0 = vector.load %arg1[%c0, %c0_0] : memref<8x32xf32, #tpu.memory_space<vmem>>, vector<8x32xf32>
    %1 = arith.mulf %0, %0 : vector<8x32xf32>
    %cst = arith.constant dense<0.000000e+00> : vector<8xf32>
    %2 = vector.multi_reduction <add>, %1, %cst [1] : vector<8x32xf32> to vector<8xf32>
    %3 = vector.shape_cast %2 : vector<8xf32> to vector<8x1xf32>
    %cst_1 = arith.constant 1.000000e-24 : f32
    %4 = vector.broadcast %cst_1 : f32 to vector<8x1xf32>
    %5 = arith.maximumf %3, %4 : vector<8x1xf32>
    %6 = math.rsqrt %5 : vector<8x1xf32>
    %c0_2 = arith.constant 0 : index
    %c0_3 = arith.constant 0 : index
    %c0_4 = arith.constant 0 : index
    %7 = vector.load %arg2[%c0_2, %c0_3, %c0_4] : memref<3x32x128xf32, #tpu.memory_space<vmem>>, vector<1x32x128xf32>
    %8 = vector.shape_cast %7 : vector<1x32x128xf32> to vector<32x128xf32>
    %9 = arith.mulf %8, %8 : vector<32x128xf32>
    %cst_5 = arith.constant dense<0.000000e+00> : vector<128xf32>
    %10 = vector.multi_reduction <add>, %9, %cst_5 [0] : vector<32x128xf32> to vector<128xf32>
    %11 = vector.shape_cast %10 : vector<128xf32> to vector<1x128xf32>
    %cst_6 = arith.constant 1.000000e-24 : f32
    %12 = vector.broadcast %cst_6 : f32 to vector<1x128xf32>
    %13 = arith.maximumf %11, %12 : vector<1x128xf32>
    %14 = math.rsqrt %13 : vector<1x128xf32>
    %cst_7 = arith.constant dense<0.000000e+00> : vector<8x128xf32>
    %15 = tpu.matmul %0, %8, %cst_7 {dimension_numbers = #tpu.dot_dimension_numbers<[1], [0], [0], [1], [0, 0, 1, 1], [], []>} : vector<8x32xf32>, vector<32x128xf32>, vector<8x128xf32> -> vector<8x128xf32>
    %16 = vector.broadcast %14 : vector<1x128xf32> to vector<8x128xf32>
    %17 = arith.mulf %15, %16 : vector<8x128xf32>
    %c1 = arith.constant 1 : index
    %c0_8 = arith.constant 0 : index
    %c0_9 = arith.constant 0 : index
    %18 = vector.load %arg2[%c1, %c0_8, %c0_9] : memref<3x32x128xf32, #tpu.memory_space<vmem>>, vector<1x32x128xf32>
    %19 = vector.shape_cast %18 : vector<1x32x128xf32> to vector<32x128xf32>
    %20 = arith.mulf %19, %19 : vector<32x128xf32>
    %cst_10 = arith.constant dense<0.000000e+00> : vector<128xf32>
    %21 = vector.multi_reduction <add>, %20, %cst_10 [0] : vector<32x128xf32> to vector<128xf32>
    %22 = vector.shape_cast %21 : vector<128xf32> to vector<1x128xf32>
    %cst_11 = arith.constant 1.000000e-24 : f32
    %23 = vector.broadcast %cst_11 : f32 to vector<1x128xf32>
    %24 = arith.maximumf %22, %23 : vector<1x128xf32>
    %25 = math.rsqrt %24 : vector<1x128xf32>
    %cst_12 = arith.constant dense<0.000000e+00> : vector<8x128xf32>
    %26 = tpu.matmul %0, %19, %cst_12 {dimension_numbers = #tpu.dot_dimension_numbers<[1], [0], [0], [1], [0, 0, 1, 1], [], []>} : vector<8x32xf32>, vector<32x128xf32>, vector<8x128xf32> -> vector<8x128xf32>
    %27 = vector.broadcast %25 : vector<1x128xf32> to vector<8x128xf32>
    %28 = arith.mulf %26, %27 : vector<8x128xf32>
    %29 = arith.maximumf %17, %28 : vector<8x128xf32>
    %c2 = arith.constant 2 : index
    %c0_13 = arith.constant 0 : index
    %c0_14 = arith.constant 0 : index
    %30 = vector.load %arg2[%c2, %c0_13, %c0_14] : memref<3x32x128xf32, #tpu.memory_space<vmem>>, vector<1x32x128xf32>
    %31 = vector.shape_cast %30 : vector<1x32x128xf32> to vector<32x128xf32>
    %32 = arith.mulf %31, %31 : vector<32x128xf32>
    %cst_15 = arith.constant dense<0.000000e+00> : vector<128xf32>
    %33 = vector.multi_reduction <add>, %32, %cst_15 [0] : vector<32x128xf32> to vector<128xf32>
    %34 = vector.shape_cast %33 : vector<128xf32> to vector<1x128xf32>
    %cst_16 = arith.constant 1.000000e-24 : f32
    %35 = vector.broadcast %cst_16 : f32 to vector<1x128xf32>
    %36 = arith.maximumf %34, %35 : vector<1x128xf32>
    %37 = math.rsqrt %36 : vector<1x128xf32>
    %cst_17 = arith.constant dense<0.000000e+00> : vector<8x128xf32>
    %38 = tpu.matmul %0, %31, %cst_17 {dimension_numbers = #tpu.dot_dimension_numbers<[1], [0], [0], [1], [0, 0, 1, 1], [], []>} : vector<8x32xf32>, vector<32x128xf32>, vector<8x128xf32> -> vector<8x128xf32>
    %39 = vector.broadcast %37 : vector<1x128xf32> to vector<8x128xf32>
    %40 = arith.mulf %38, %39 : vector<8x128xf32>
    %41 = arith.maximumf %29, %40 : vector<8x128xf32>
    %42 = vector.broadcast %6 : vector<8x1xf32> to vector<8x128xf32>
    %43 = arith.mulf %41, %42 : vector<8x128xf32>
    %c0_18 = arith.constant 0 : index
    %c0_19 = arith.constant 0 : index
    %44 = vector.load %arg3[%c0_18, %c0_19] : memref<8x128xf32, #tpu.memory_space<vmem>>, vector<8x128xf32>
    tpu.vector_store %arg3[%c0_18, %c0_19], %43 {strides = array<i32>} : memref<8x128xf32, #tpu.memory_space<vmem>>, vector<8x128xf32>,
    return
  }
  func.func @transform_0(%arg0: i32) -> (i32, i32) {
    %c0_i32 = arith.constant 0 : i32
    %c0_i32_0 = arith.constant 0 : i32
    %c0_i32_1 = arith.constant 0 : i32
    return %c0_i32, %c0_i32_0 : i32, i32
  }
  func.func @transform_1(%arg0: i32) -> (i32, i32, i32) {
    %c0_i32 = arith.constant 0 : i32
    %c0_i32_0 = arith.constant 0 : i32
    %c0_i32_1 = arith.constant 0 : i32
    return %c0_i32, %c0_i32_0, %arg0 : i32, i32, i32
  }
  func.func @transform_2(%arg0: i32) -> (i32, i32) {
    %c0_i32 = arith.constant 0 : i32
    %c0_i32_0 = arith.constant 0 : i32
    return %c0_i32, %arg0 : i32, i32
  }
}

</mosaic_0001>

<llo_original>
// kernel: tpu_custom_call.1
$region0: #{tpu_custom_call.1}
  #allocation0 [shape = 'u32[]', space=smem, size = 0x4, offset = 0x4, fixed_abs, tag = 'smem constant byte address 0x4 - core index']
  #allocation1 [shape = 'u32[144,128]{1,0:T(1,128)}', space=vmem, size = 0x12000, scoped, tag = 'internal scratch']
  %s0 = inlined_call_operand.hbm [shape: f32[8,32], index: 0, kind: input, shape index: {}]
  %s1 = inlined_call_operand.hbm [shape: f32[3,32,128], index: 1, kind: input, shape index: {}]
  %s2 = inlined_call_operand.hbm [shape: f32[8,128], index: 2, kind: output, shape index: {}]
  %s3 = sld [smem:[#allocation0]]
  $region26: #{tpu_custom_call.1} parent=0
    _
  %s5 = ssub.s32 1, %s3
  %s6 = scalar_select 0, %s5, %s3
  $region1: #{tpu_custom_call.1} parent=0
    #allocation2 [shape = 'u8[4096]{0}', space=vmem, size = 0x1000, scoped, tag = 'input window, operand 0, single buffered']
    #allocation3 [shape = 's32[1]{0}', space=sflag, size = 0x4, scoped, tag = 'scoped memory for tpu_custom_call.1']
    #allocation4 [shape = 's32[1]{0}', space=sflag, size = 0x4, scoped, tag = 'scoped memory for tpu_custom_call.1']
    #allocation5 [shape = 'u8[49152]{0}', space=vmem, size = 0xc000, scoped, tag = 'input window, operand 1, single buffered']
    #allocation6 [shape = 's32[1]{0}', space=sflag, size = 0x4, scoped, tag = 'scoped memory for tpu_custom_call.1']
    #allocation7 [shape = 'u8[4096]{0}', space=vmem, size = 0x1000, scoped, tag = 'output window, operand 0, single buffered']
    %7 = vsyncpa [#allocation3], 0
    %8 = vsyncpa [#allocation6], 0
    %9 = vsyncpa [#allocation4], 0
    // Predicated region
    $region2: #{tpu_custom_call.1} parent=1 // pred_check
      _
    $region3: #{tpu_custom_call.1} parent=1 // pred_check_branch
      %11 = sbr.rel (0) target = $region5
    $region4: #{tpu_custom_call.1} parent=1 // pred_region
      %s13 = ssub.s32 128, 128
      %14 = vsyncadd [#allocation3], %s13
      %s16 = sshll.u32 [#allocation2], 4
      %s17 = int_to_ptr.vmem [resolvable:$true] %s16
      %19 = dma.hbm_to_vmem [thread:$0]  %s0, 128, %s17, [#allocation3]
    $region5: #{tpu_custom_call.1} parent=1 // pred_fallthru
      _
    // Predicated region
    $region6: #{tpu_custom_call.1} parent=1 // pred_check
      _
    $region7: #{tpu_custom_call.1} parent=1 // pred_check_branch
      %21 = sbr.rel (0) target = $region9
    $region8: #{tpu_custom_call.1} parent=1 // pred_region
      %s23 = ssub.s32 1536, 1536
      %24 = vsyncadd [#allocation6], %s23
      %s25 = sshll.u32 [#allocation5], 4
      %s26 = int_to_ptr.vmem [resolvable:$true] %s25
      %31 = dma.hbm_to_vmem [thread:$0]  %s1, 1536, %s26, [#allocation6], 128, 128, 8
    $region9: #{tpu_custom_call.1} parent=1 // pred_fallthru
      _
    // Predicated region
    $region10: #{tpu_custom_call.1} parent=1 // pred_check
      _
    $region11: #{tpu_custom_call.1} parent=1 // pred_check_branch
      %33 = sbr.rel (0) target = $region13
    $region12: #{tpu_custom_call.1} parent=1 // pred_region
      %34 = dma.done [#allocation3], 128
    $region13: #{tpu_custom_call.1} parent=1 // pred_fallthru
      _
    // Predicated region
    $region14: #{tpu_custom_call.1} parent=1 // pred_check
      _
    $region15: #{tpu_custom_call.1} parent=1 // pred_check_branch
      %36 = sbr.rel (0) target = $region17
    $region16: #{tpu_custom_call.1} parent=1 // pred_region
      %37 = dma.done [#allocation6], 1536
    $region17: #{tpu_custom_call.1} parent=1 // pred_fallthru
      _
    %v38 = vld [vmem:[#allocation2] sm:$0xff]
    %v39 = vmul.f32 %v38, %v38
    %vm40 = vcmask 261120
    %v41 = vsel %vm40, %v39, 0.0
    %42 = vadd.xlane.f32.xlu0 %v41
    %v43 = vpop.xlane.xlu0 %42
    %v44 = vmax.f32 %v43, 1e-24
    %v45 = vrsqrt.pop %v44
    %v46 = vld [vmem:[#allocation5] sm:$0xff]
    %v47 = vld [vmem:[#allocation5 + $0x8] sm:$0xff]
    %v48 = vld [vmem:[#allocation5 + $0x10] sm:$0xff]
    %v49 = vld [vmem:[#allocation5 + $0x18] sm:$0xff]
    %v50 = vmul.f32 %v46, %v46
    %v51 = vmul.f32 %v47, %v47
    %v52 = vmul.f32 %v48, %v48
    %v53 = vmul.f32 %v49, %v49
    %v54 = vadd.f32 %v50, %v51
    %v55 = vadd.f32 %v54, %v52
    %v56 = vadd.f32 %v55, %v53
    %v57 = vrot.slane %v56, 4
    %v58 = vadd.f32 %v56, %v57
    %v59 = vrot.slane %v58, 2
    %v60 = vadd.f32 %v58, %v59
    %v61 = vrot.slane %v60, 1
    %v62 = vadd.f32 %v60, %v61
    %v63 = vmax.f32 %v62, 1e-24
    %v64 = vrsqrt.pop %v63
    %v66 = vsel %vm40, %v38, 0
    %68 = vmatprep.subr.mxu0 0.0
    %69 = vmatpush1.msra.mxu0 %v46
    %70 = vmatprep.subr.mxu0 0.0
    %71 = vmatpush1.msra.mxu0 %v47
    %72 = vmatprep.subr.mxu0 0.0
    %73 = vmatpush1.msra.mxu0 %v48
    %74 = vmatprep.subr.mxu0 0.0
    %75 = vmatpush1.msra.mxu0 %v49
    %76 = vmatprep.subr.mxu0 0.0
    %77 = vmatpush1.msra.mxu0 0.0
    %78 = vmatprep.subr.mxu0 0.0
    %79 = vmatpush1.msra.mxu0 0.0
    %80 = vmatprep.subr.mxu0 0.0
    %81 = vmatpush1.msra.mxu0 0.0
    %82 = vmatprep.subr.mxu0 0.0
    %83 = vmatpush1.msra.mxu0 0.0
    %84 = vmatprep.subr.mxu0 0.0
    %85 = vmatpush1.msra.mxu0 0.0
    %86 = vmatprep.subr.mxu0 0.0
    %87 = vmatpush1.msra.mxu0 0.0
    %88 = vmatprep.subr.mxu0 0.0
    %89 = vmatpush1.msra.mxu0 0.0
    %90 = vmatprep.subr.mxu0 0.0
    %91 = vmatpush1.msra.mxu0 0.0
    %92 = vmatprep.subr.mxu0 0.0
    %93 = vmatpush1.msra.mxu0 0.0
    %94 = vmatprep.subr.mxu0 0.0
    %95 = vmatpush1.msra.mxu0 0.0
    %96 = vmatprep.subr.mxu0 0.0
    %97 = vmatpush1.msra.mxu0 0.0
    %98 = vmatprep.subr.mxu0 0.0
    %99 = vmatpush1.msra.mxu0 0.0
    %100 = vmatprep.subr.mxu0 0.0
    %101 = vmatpush1.msra.mxu0 0.0
    %102 = vmatprep.subr.mxu0 0.0
    %103 = vmatpush1.msra.mxu0 0.0
    %104 = vmatprep.subr.mxu0 0.0
    %105 = vmatpush1.msra.mxu0 0.0
    %106 = vmatprep.subr.mxu0 0.0
    %107 = vmatpush1.msra.mxu0 0.0
    %108 = vmatprep.subr.mxu0 0.0
    %109 = vmatpush1.msra.mxu0 0.0
    %110 = vmatprep.subr.mxu0 0.0
    %111 = vmatpush1.msra.mxu0 0.0
    %112 = vmatprep.subr.mxu0 0.0
    %113 = vmatpush1.msra.mxu0 0.0
    %114 = vmatprep.subr.mxu0 0.0
    %115 = vmatpush1.msra.mxu0 0.0
    %116 = vmatprep.subr.mxu0 0.0
    %117 = vmatpush1.msra.mxu0 0.0
    %118 = vmatprep.subr.mxu0 0.0
    %119 = vmatpush1.msra.mxu0 0.0
    %120 = vmatprep.subr.mxu0 0.0
    %121 = vmatpush1.msra.mxu0 0.0
    %122 = vmatprep.subr.mxu0 0.0
    %123 = vmatpush1.msra.mxu0 0.0
    %124 = vmatprep.subr.mxu0 0.0
    %125 = vmatpush1.msra.mxu0 0.0
    %126 = vmatprep.subr.mxu0 0.0
    %127 = vmatpush1.msra.mxu0 0.0
    %128 = vmatprep.subr.mxu0 0.0
    %129 = vmatpush1.msra.mxu0 0.0
    %130 = vmatprep.subr.mxu0 0.0
    %131 = vmatpush1.msra.mxu0 0.0
    %132 = vmatprep.mubr.f32.mxu0 0.0
    %133 = vmatmul.mubr.f32.gmra.mrb[0].mxu0 %v66
    %v134 = vpop.f32.mrb[0].mxu0
    %v135 = vadd.f32 0.0, %v134
    %v136 = vpop.f32.mrb[0].mxu0
    %137 = vdwg.mxu0
    %v138 = vmul.f32 %v135, %v64
    %s139 = scalar_lea.vmem [#allocation5], 32
    %v140 = vld [vmem:[%s139] sm:$0xff]
    %v141 = vld [vmem:[%s139 + $0x8] sm:$0xff]
    %v142 = vld [vmem:[%s139 + $0x10] sm:$0xff]
    %v143 = vld [vmem:[%s139 + $0x18] sm:$0xff]
    %v144 = vmul.f32 %v140, %v140
    %v145 = vmul.f32 %v141, %v141
    %v146 = vmul.f32 %v142, %v142
    %v147 = vmul.f32 %v143, %v143
    %v148 = vadd.f32 %v144, %v145
    %v149 = vadd.f32 %v148, %v146
    %v150 = vadd.f32 %v149, %v147
    %v151 = vrot.slane %v150, 4
    %v152 = vadd.f32 %v150, %v151
    %v153 = vrot.slane %v152, 2
    %v154 = vadd.f32 %v152, %v153
    %v155 = vrot.slane %v154, 1
    %v156 = vadd.f32 %v154, %v155
    %v157 = vmax.f32 %v156, 1e-24
    %v158 = vrsqrt.pop %v157
    %159 = vmatprep.subr.mxu0 0.0
    %160 = vmatpush1.msra.mxu0 %v140
    %161 = vmatprep.subr.mxu0 0.0
    %162 = vmatpush1.msra.mxu0 %v141
    %163 = vmatprep.subr.mxu0 0.0
    %164 = vmatpush1.msra.mxu0 %v142
    %165 = vmatprep.subr.mxu0 0.0
    %166 = vmatpush1.msra.mxu0 %v143
    %167 = vmatprep.subr.mxu0 0.0
    %168 = vmatpush1.msra.mxu0 0.0
    %169 = vmatprep.subr.mxu0 0.0
    %170 = vmatpush1.msra.mxu0 0.0
    %171 = vmatprep.subr.mxu0 0.0
    %172 = vmatpush1.msra.mxu0 0.0
    %173 = vmatprep.subr.mxu0 0.0
    %174 = vmatpush1.msra.mxu0 0.0
    %175 = vmatprep.subr.mxu0 0.0
    %176 = vmatpush1.msra.mxu0 0.0
    %177 = vmatprep.subr.mxu0 0.0
    %178 = vmatpush1.msra.mxu0 0.0
    %179 = vmatprep.subr.mxu0 0.0
    %180 = vmatpush1.msra.mxu0 0.0
    %181 = vmatprep.subr.mxu0 0.0
    %182 = vmatpush1.msra.mxu0 0.0
    %183 = vmatprep.subr.mxu0 0.0
    %184 = vmatpush1.msra.mxu0 0.0
    %185 = vmatprep.subr.mxu0 0.0
    %186 = vmatpush1.msra.mxu0 0.0
    %187 = vmatprep.subr.mxu0 0.0
    %188 = vmatpush1.msra.mxu0 0.0
    %189 = vmatprep.subr.mxu0 0.0
    %190 = vmatpush1.msra.mxu0 0.0
    %191 = vmatprep.subr.mxu0 0.0
    %192 = vmatpush1.msra.mxu0 0.0
    %193 = vmatprep.subr.mxu0 0.0
    %194 = vmatpush1.msra.mxu0 0.0
    %195 = vmatprep.subr.mxu0 0.0
    %196 = vmatpush1.msra.mxu0 0.0
    %197 = vmatprep.subr.mxu0 0.0
    %198 = vmatpush1.msra.mxu0 0.0
    %199 = vmatprep.subr.mxu0 0.0
    %200 = vmatpush1.msra.mxu0 0.0
    %201 = vmatprep.subr.mxu0 0.0
    %202 = vmatpush1.msra.mxu0 0.0
    %203 = vmatprep.subr.mxu0 0.0
    %204 = vmatpush1.msra.mxu0 0.0
    %205 = vmatprep.subr.mxu0 0.0
    %206 = vmatpush1.msra.mxu0 0.0
    %207 = vmatprep.subr.mxu0 0.0
    %208 = vmatpush1.msra.mxu0 0.0
    %209 = vmatprep.subr.mxu0 0.0
    %210 = vmatpush1.msra.mxu0 0.0
    %211 = vmatprep.subr.mxu0 0.0
    %212 = vmatpush1.msra.mxu0 0.0
    %213 = vmatprep.subr.mxu0 0.0
    %214 = vmatpush1.msra.mxu0 0.0
    %215 = vmatprep.subr.mxu0 0.0
    %216 = vmatpush1.msra.mxu0 0.0
    %217 = vmatprep.subr.mxu0 0.0
    %218 = vmatpush1.msra.mxu0 0.0
    %219 = vmatprep.subr.mxu0 0.0
    %220 = vmatpush1.msra.mxu0 0.0
    %221 = vmatprep.subr.mxu0 0.0
    %222 = vmatpush1.msra.mxu0 0.0
    %223 = vmatprep.mubr.f32.mxu0 0.0
    %224 = vmatmul.mubr.f32.gmra.mrb[0].mxu0 %v66
    %v225 = vpop.f32.mrb[0].mxu0
    %v226 = vadd.f32 0.0, %v225
    %v227 = vpop.f32.mrb[0].mxu0
    %228 = vdwg.mxu0
    %v229 = vmul.f32 %v226, %v158
    %v230 = vmax.f32 %v138, %v229
    %s231 = scalar_lea.vmem [#allocation5], 64
    %v232 = vld [vmem:[%s231] sm:$0xff]
    %v233 = vld [vmem:[%s231 + $0x8] sm:$0xff]
    %v234 = vld [vmem:[%s231 + $0x10] sm:$0xff]
    %v235 = vld [vmem:[%s231 + $0x18] sm:$0xff]
    %v236 = vmul.f32 %v232, %v232
    %v237 = vmul.f32 %v233, %v233
    %v238 = vmul.f32 %v234, %v234
    %v239 = vmul.f32 %v235, %v235
    %v240 = vadd.f32 %v236, %v237
    %v241 = vadd.f32 %v240, %v238
    %v242 = vadd.f32 %v241, %v239
    %v243 = vrot.slane %v242, 4
    %v244 = vadd.f32 %v242, %v243
    %v245 = vrot.slane %v244, 2
    %v246 = vadd.f32 %v244, %v245
    %v247 = vrot.slane %v246, 1
    %v248 = vadd.f32 %v246, %v247
    %v249 = vmax.f32 %v248, 1e-24
    %v250 = vrsqrt.pop %v249
    %251 = vmatprep.subr.mxu0 0.0
    %252 = vmatpush1.msra.mxu0 %v232
    %253 = vmatprep.subr.mxu0 0.0
    %254 = vmatpush1.msra.mxu0 %v233
    %255 = vmatprep.subr.mxu0 0.0
    %256 = vmatpush1.msra.mxu0 %v234
    %257 = vmatprep.subr.mxu0 0.0
    %258 = vmatpush1.msra.mxu0 %v235
    %259 = vmatprep.subr.mxu0 0.0
    %260 = vmatpush1.msra.mxu0 0.0
    %261 = vmatprep.subr.mxu0 0.0
    %262 = vmatpush1.msra.mxu0 0.0
    %263 = vmatprep.subr.mxu0 0.0
    %264 = vmatpush1.msra.mxu0 0.0
    %265 = vmatprep.subr.mxu0 0.0
    %266 = vmatpush1.msra.mxu0 0.0
    %267 = vmatprep.subr.mxu0 0.0
    %268 = vmatpush1.msra.mxu0 0.0
    %269 = vmatprep.subr.mxu0 0.0
    %270 = vmatpush1.msra.mxu0 0.0
    %271 = vmatprep.subr.mxu0 0.0
    %272 = vmatpush1.msra.mxu0 0.0
    %273 = vmatprep.subr.mxu0 0.0
    %274 = vmatpush1.msra.mxu0 0.0
    %275 = vmatprep.subr.mxu0 0.0
    %276 = vmatpush1.msra.mxu0 0.0
    %277 = vmatprep.subr.mxu0 0.0
    %278 = vmatpush1.msra.mxu0 0.0
    %279 = vmatprep.subr.mxu0 0.0
    %280 = vmatpush1.msra.mxu0 0.0
    %281 = vmatprep.subr.mxu0 0.0
    %282 = vmatpush1.msra.mxu0 0.0
    %283 = vmatprep.subr.mxu0 0.0
    %284 = vmatpush1.msra.mxu0 0.0
    %285 = vmatprep.subr.mxu0 0.0
    %286 = vmatpush1.msra.mxu0 0.0
    %287 = vmatprep.subr.mxu0 0.0
    %288 = vmatpush1.msra.mxu0 0.0
    %289 = vmatprep.subr.mxu0 0.0
    %290 = vmatpush1.msra.mxu0 0.0
    %291 = vmatprep.subr.mxu0 0.0
    %292 = vmatpush1.msra.mxu0 0.0
    %293 = vmatprep.subr.mxu0 0.0
    %294 = vmatpush1.msra.mxu0 0.0
    %295 = vmatprep.subr.mxu0 0.0
    %296 = vmatpush1.msra.mxu0 0.0
    %297 = vmatprep.subr.mxu0 0.0
    %298 = vmatpush1.msra.mxu0 0.0
    %299 = vmatprep.subr.mxu0 0.0
    %300 = vmatpush1.msra.mxu0 0.0
    %301 = vmatprep.subr.mxu0 0.0
    %302 = vmatpush1.msra.mxu0 0.0
    %303 = vmatprep.subr.mxu0 0.0
    %304 = vmatpush1.msra.mxu0 0.0
    %305 = vmatprep.subr.mxu0 0.0
    %306 = vmatpush1.msra.mxu0 0.0
    %307 = vmatprep.subr.mxu0 0.0
    %308 = vmatpush1.msra.mxu0 0.0
    %309 = vmatprep.subr.mxu0 0.0
    %310 = vmatpush1.msra.mxu0 0.0
    %311 = vmatprep.subr.mxu0 0.0
    %312 = vmatpush1.msra.mxu0 0.0
    %313 = vmatprep.subr.mxu0 0.0
    %314 = vmatpush1.msra.mxu0 0.0
    %315 = vmatprep.mubr.f32.mxu0 0.0
    %316 = vmatmul.mubr.f32.gmra.mrb[0].mxu0 %v66
    %v317 = vpop.f32.mrb[0].mxu0
    %v318 = vadd.f32 0.0, %v317
    %v319 = vpop.f32.mrb[0].mxu0
    %320 = vdwg.mxu0
    %v321 = vmul.f32 %v318, %v250
    %v322 = vmax.f32 %v230, %v321
    %v323 = vmul.f32 %v322, %v45
    %324 = vst [vmem:[#allocation7] sm:$0xff] %v323
    // Predicated region
    $region18: #{tpu_custom_call.1} parent=1 // pred_check
      _
    $region19: #{tpu_custom_call.1} parent=1 // pred_check_branch
      %326 = sbr.rel (0) target = $region21
    $region20: #{tpu_custom_call.1} parent=1 // pred_region
      %s328 = ssub.s32 128, 128
      %329 = vsyncadd [#allocation4], %s328
      %s331 = sshll.u32 [#allocation7], 4
      %s332 = int_to_ptr.vmem [resolvable:$true] %s331
      %334 = dma.vmem_to_hbm [thread:$0]  %s332, 128, %s2, [#allocation4]
    $region21: #{tpu_custom_call.1} parent=1 // pred_fallthru
      _
    // Predicated region
    $region22: #{tpu_custom_call.1} parent=1 // pred_check
      _
    $region23: #{tpu_custom_call.1} parent=1 // pred_check_branch
      %336 = sbr.rel (0) target = $region25
    $region24: #{tpu_custom_call.1} parent=1 // pred_region
      %337 = dma.done [#allocation4], 128
    $region25: #{tpu_custom_call.1} parent=1 // pred_fallthru
      _
    %338 = vsyncpa [#allocation3], 1
    %339 = vsyncpa [#allocation6], 1
    %340 = vsyncpa [#allocation4], 1

</llo_original>
